<compile_context>
chip_gen: v7x
topology: tpu7x:2x2x1
jax: 0.10.0
libtpu: 0.0.40
codegen_flags: <defaults>
</compile_context>

<pallas_src>
import jax
import jax.numpy as jnp
from jax import lax
from jax.experimental import pallas as pl
from jax.experimental.pallas import tpu as pltpu


def gcn_kernel(x_ref, w_ref, o_ref):
    """One (tm, out_pad) output tile: relu(x @ w.T) with w resident in VMEM."""
    h = lax.dot_general(
        x_ref[...],
        w_ref[...],
        dimension_numbers=(((1,), (1,)), ((), ())),  # contract K with K (w is [out, K])
        preferred_element_type=jnp.float32,
    )
    o_ref[...] = jnp.maximum(h, 0.0).astype(o_ref.dtype)


def _round_up(x, m):
    return ((x + m - 1) // m) * m


def gcn_forward(feature, weight, *, tm=512):
    """feature: [N, in_feats]; weight: [out_feats, in_feats] (PyTorch Linear layout)."""
    N, K = feature.shape
    out_feats, Kw = weight.shape
    assert K == Kw, "feature/in_feats mismatch"

    # Pad to lane/sublane-friendly shapes (zero padding is exact for matmul+ReLU).
    K_pad = _round_up(K, 128)          # lane-dense X loads + whole-array W block
    out_pad = _round_up(out_feats, 128)  # lane-dense (unmasked) output stores
    tm = min(tm, _round_up(N, 8))      # don't over-pad tiny N; keep sublane multiple

    x_itemsize = jnp.dtype(feature.dtype).itemsize
    w_itemsize = jnp.dtype(weight.dtype).itemsize

    def vmem_bytes(t):
        # double-buffered X + double-buffered out + resident W
        return (2 * t * (K_pad + out_pad)) * x_itemsize + out_pad * K_pad * w_itemsize

    # Shrink the node tile until it fits a conservative budget (portable to v7x 64 MiB/TC).
    while tm > 8 and vmem_bytes(tm) > 40 * 1024 * 1024:
        tm = max(8, tm // 2)

    N_pad = _round_up(N, tm)

    x = feature
    if (N_pad, K_pad) != (N, K):
        x = jnp.pad(x, ((0, N_pad - N), (0, K_pad - K)))
    w = weight
    if (out_pad, K_pad) != (out_feats, K):
        w = jnp.pad(w, ((0, out_pad - out_feats), (0, K_pad - K)))

    vmem_limit = int(min(48 * 1024 * 1024, max(2 * vmem_bytes(tm), 16 * 1024 * 1024)))

    out = pl.pallas_call(
        gcn_kernel,
        out_shape=jax.ShapeDtypeStruct((N_pad, out_pad), feature.dtype),
        grid_spec=pltpu.PrefetchScalarGridSpec(
            num_scalar_prefetch=0,
            grid=(N_pad // tm,),
            in_specs=[
                pl.BlockSpec((tm, K_pad), lambda i: (i, 0)),       # streaming X tile
                pl.BlockSpec((out_pad, K_pad), lambda i: (0, 0)),  # weight: VMEM-resident
            ],
            out_specs=pl.BlockSpec((tm, out_pad), lambda i: (i, 0)),
        ),
        compiler_params=pltpu.CompilerParams(
            dimension_semantics=("parallel",),
            vmem_limit_bytes=vmem_limit,
        ),
    )(x, w)

    return out[:N, :out_feats]


if __name__ == "__main__":
    # Small GCN-like shapes, deliberately NOT tile-multiples to exercise padding:
    # N nodes, in_feats -> out_feats (e.g. a small citation-graph layer).
    N, in_feats, out_feats = 200, 60, 16

    key = jax.random.PRNGKey(0)
    k_feat, k_w = jax.random.split(key)

    feature = jax.random.normal(k_feat, (N, in_feats), dtype=jnp.float32)
    # nn.Linear(in_feats, out_feats, bias=False).weight has shape [out_feats, in_feats]
    weight = jax.random.normal(k_w, (out_feats, in_feats), dtype=jnp.float32) * 0.05

    out = gcn_forward(feature, weight)
    out = jax.block_until_ready(out)

    # Reference: relu(feature @ W^T)
    ref = jnp.maximum(feature @ weight.T, 0.0)
    assert out.shape == (N, out_feats)
    assert jnp.allclose(out, ref, atol=1e-4, rtol=1e-4)

    print("KERNEL_OK")
</pallas_src>

<mosaic_0001>
module attributes {stable_mosaic.version = 11 : i64} {
  func.func @gcn_kernel(%arg0: i32, %arg1: memref<200x128xf32, #tpu.memory_space<vmem>>, %arg2: memref<128x128xf32, #tpu.memory_space<vmem>>, %arg3: memref<200x128xf32, #tpu.memory_space<vmem>>) attributes {dimension_semantics = [#tpu.dimension_semantics<parallel>], iteration_bounds = array<i64: 1>, scalar_prefetch = 0 : i64, scratch_operands = 0 : i64, tpu.core_type = #tpu.core_type<tc>, window_params = [{transform_indices = @transform_0, window_bounds = array<i64: 200, 128>}, {pipeline_mode = #tpu.pipeline_mode<synchronous>, transform_indices = @transform_1, window_bounds = array<i64: 128, 128>}, {transform_indices = @transform_2, window_bounds = array<i64: 200, 128>}]} {
    %c0 = arith.constant 0 : index
    %c0_0 = arith.constant 0 : index
    %0 = vector.load %arg1[%c0, %c0_0] : memref<200x128xf32, #tpu.memory_space<vmem>>, vector<200x128xf32>
    %c0_1 = arith.constant 0 : index
    %c0_2 = arith.constant 0 : index
    %1 = vector.load %arg2[%c0_1, %c0_2] : memref<128x128xf32, #tpu.memory_space<vmem>>, vector<128x128xf32>
    %cst = arith.constant dense<0.000000e+00> : vector<200x128xf32>
    %2 = tpu.matmul %0, %1, %cst {dimension_numbers = #tpu.dot_dimension_numbers<[1], [1], [0], [0], [0, 0, 1, 0], [], []>} : vector<200x128xf32>, vector<128x128xf32>, vector<200x128xf32> -> vector<200x128xf32>
    %cst_3 = arith.constant 0.000000e+00 : f32
    %3 = vector.broadcast %cst_3 : f32 to vector<200x128xf32>
    %4 = arith.maximumf %2, %3 : vector<200x128xf32>
    %c0_4 = arith.constant 0 : index
    %c0_5 = arith.constant 0 : index
    %5 = vector.load %arg3[%c0_4, %c0_5] : memref<200x128xf32, #tpu.memory_space<vmem>>, vector<200x128xf32>
    tpu.vector_store %arg3[%c0_4, %c0_5], %4 {strides = array<i32>} : memref<200x128xf32, #tpu.memory_space<vmem>>, vector<200x128xf32>,
    return
  }
  func.func @transform_0(%arg0: i32) -> (i32, i32) {
    %c0_i32 = arith.constant 0 : i32
    %c0_i32_0 = arith.constant 0 : i32
    return %arg0, %c0_i32 : i32, i32
  }
  func.func @transform_1(%arg0: i32) -> (i32, i32) {
    %c0_i32 = arith.constant 0 : i32
    %c0_i32_0 = arith.constant 0 : i32
    %c0_i32_1 = arith.constant 0 : i32
    return %c0_i32, %c0_i32_0 : i32, i32
  }
  func.func @transform_2(%arg0: i32) -> (i32, i32) {
    %c0_i32 = arith.constant 0 : i32
    %c0_i32_0 = arith.constant 0 : i32
    return %arg0, %c0_i32 : i32, i32
  }
}

</mosaic_0001>

<llo_original>
// kernel: tpu_custom_call.1
$region0: #{tpu_custom_call.1}
  #allocation0 [shape = 'u32[]', space=smem, size = 0x4, offset = 0x4, fixed_abs, tag = 'smem constant byte address 0x4 - core index']
  #allocation1 [shape = 'u32[144,128]{1,0:T(1,128)}', space=vmem, size = 0x12000, scoped, tag = 'internal scratch']
  %s0 = inlined_call_operand.hbm [shape: f32[200,128], index: 0, kind: input, shape index: {}]
  %s1 = inlined_call_operand.hbm [shape: f32[128,128], index: 1, kind: input, shape index: {}]
  %s2 = inlined_call_operand.hbm [shape: f32[200,128], index: 2, kind: output, shape index: {}]
  %s3 = sld [smem:[#allocation0]]
  $region26: #{tpu_custom_call.1} parent=0
    _
  %s5 = ssub.s32 1, %s3
  %s6 = scalar_select 0, %s5, %s3
  $region1: #{tpu_custom_call.1} parent=0
    #allocation2 [shape = 'u8[102400]{0}', space=vmem, size = 0x19000, scoped, tag = 'input window, operand 0, single buffered']
    #allocation3 [shape = 's32[1]{0}', space=sflag, size = 0x4, scoped, tag = 'scoped memory for tpu_custom_call.1']
    #allocation4 [shape = 's32[1]{0}', space=sflag, size = 0x4, scoped, tag = 'scoped memory for tpu_custom_call.1']
    #allocation5 [shape = 'u8[65536]{0}', space=vmem, size = 0x10000, scoped, tag = 'input window, operand 1, single buffered']
    #allocation6 [shape = 's32[1]{0}', space=sflag, size = 0x4, scoped, tag = 'scoped memory for tpu_custom_call.1']
    #allocation7 [shape = 'u8[102400]{0}', space=vmem, size = 0x19000, scoped, tag = 'output window, operand 0, single buffered']
    %7 = vsyncpa [#allocation3], 0
    %8 = vsyncpa [#allocation6], 0
    %9 = vsyncpa [#allocation4], 0
    // Predicated region
    $region2: #{tpu_custom_call.1} parent=1 // pred_check
      _
    $region3: #{tpu_custom_call.1} parent=1 // pred_check_branch
      %11 = sbr.rel (0) target = $region5
    $region4: #{tpu_custom_call.1} parent=1 // pred_region
      %s13 = ssub.s32 3200, 3200
      %14 = vsyncadd [#allocation3], %s13
      %s15 = sshll.u32 [#allocation2], 4
      %s16 = int_to_ptr.vmem [resolvable:$true] %s15
      %21 = dma.hbm_to_vmem [thread:$0]  %s0, 3200, %s16, [#allocation3], 128, 128, 8
    $region5: #{tpu_custom_call.1} parent=1 // pred_fallthru
      _
    // Predicated region
    $region6: #{tpu_custom_call.1} parent=1 // pred_check
      _
    $region7: #{tpu_custom_call.1} parent=1 // pred_check_branch
      %23 = sbr.rel (0) target = $region9
    $region8: #{tpu_custom_call.1} parent=1 // pred_region
      %s25 = ssub.s32 2048, 2048
      %26 = vsyncadd [#allocation6], %s25
      %s27 = sshll.u32 [#allocation5], 4
      %s28 = int_to_ptr.vmem [resolvable:$true] %s27
      %33 = dma.hbm_to_vmem [thread:$0]  %s1, 2048, %s28, [#allocation6], 128, 128, 8
    $region9: #{tpu_custom_call.1} parent=1 // pred_fallthru
      _
    // Predicated region
    $region10: #{tpu_custom_call.1} parent=1 // pred_check
      _
    $region11: #{tpu_custom_call.1} parent=1 // pred_check_branch
      %35 = sbr.rel (0) target = $region13
    $region12: #{tpu_custom_call.1} parent=1 // pred_region
      %36 = dma.done [#allocation3], 3200
    $region13: #{tpu_custom_call.1} parent=1 // pred_fallthru
      _
    // Predicated region
    $region14: #{tpu_custom_call.1} parent=1 // pred_check
      _
    $region15: #{tpu_custom_call.1} parent=1 // pred_check_branch
      %38 = sbr.rel (0) target = $region17
    $region16: #{tpu_custom_call.1} parent=1 // pred_region
      %39 = dma.done [#allocation6], 2048
    $region17: #{tpu_custom_call.1} parent=1 // pred_fallthru
      _
    %v40 = vld [vmem:[#allocation2] sm:$0xff]
    %v41 = vld [vmem:[#allocation2 + $0x8] sm:$0xff]
    %v42 = vld [vmem:[#allocation2 + $0x10] sm:$0xff]
    %v43 = vld [vmem:[#allocation2 + $0x18] sm:$0xff]
    %v44 = vld [vmem:[#allocation2 + $0x20] sm:$0xff]
    %v45 = vld [vmem:[#allocation2 + $0x28] sm:$0xff]
    %v46 = vld [vmem:[#allocation2 + $0x30] sm:$0xff]
    %v47 = vld [vmem:[#allocation2 + $0x38] sm:$0xff]
    %v48 = vld [vmem:[#allocation2 + $0x40] sm:$0xff]
    %v49 = vld [vmem:[#allocation2 + $0x48] sm:$0xff]
    %v50 = vld [vmem:[#allocation2 + $0x50] sm:$0xff]
    %v51 = vld [vmem:[#allocation2 + $0x58] sm:$0xff]
    %v52 = vld [vmem:[#allocation2 + $0x60] sm:$0xff]
    %v53 = vld [vmem:[#allocation2 + $0x68] sm:$0xff]
    %v54 = vld [vmem:[#allocation2 + $0x70] sm:$0xff]
    %v55 = vld [vmem:[#allocation2 + $0x78] sm:$0xff]
    %v56 = vld [vmem:[#allocation2 + $0x80] sm:$0xff]
    %v57 = vld [vmem:[#allocation2 + $0x88] sm:$0xff]
    %v58 = vld [vmem:[#allocation2 + $0x90] sm:$0xff]
    %v59 = vld [vmem:[#allocation2 + $0x98] sm:$0xff]
    %v60 = vld [vmem:[#allocation2 + $0xa0] sm:$0xff]
    %v61 = vld [vmem:[#allocation2 + $0xa8] sm:$0xff]
    %v62 = vld [vmem:[#allocation2 + $0xb0] sm:$0xff]
    %v63 = vld [vmem:[#allocation2 + $0xb8] sm:$0xff]
    %v64 = vld [vmem:[#allocation2 + $0xc0] sm:$0xff]
    %v65 = vld [vmem:[#allocation5] sm:$0xff]
    %v66 = vld [vmem:[#allocation5 + $0x8] sm:$0xff]
    %v67 = vld [vmem:[#allocation5 + $0x10] sm:$0xff]
    %v68 = vld [vmem:[#allocation5 + $0x18] sm:$0xff]
    %v69 = vld [vmem:[#allocation5 + $0x20] sm:$0xff]
    %v70 = vld [vmem:[#allocation5 + $0x28] sm:$0xff]
    %v71 = vld [vmem:[#allocation5 + $0x30] sm:$0xff]
    %v72 = vld [vmem:[#allocation5 + $0x38] sm:$0xff]
    %v73 = vld [vmem:[#allocation5 + $0x40] sm:$0xff]
    %v74 = vld [vmem:[#allocation5 + $0x48] sm:$0xff]
    %v75 = vld [vmem:[#allocation5 + $0x50] sm:$0xff]
    %v76 = vld [vmem:[#allocation5 + $0x58] sm:$0xff]
    %v77 = vld [vmem:[#allocation5 + $0x60] sm:$0xff]
    %v78 = vld [vmem:[#allocation5 + $0x68] sm:$0xff]
    %v79 = vld [vmem:[#allocation5 + $0x70] sm:$0xff]
    %v80 = vld [vmem:[#allocation5 + $0x78] sm:$0xff]
    %81 = vmatprep.subr.mxu0 0.0
    %82 = vmatpush1.xpose.msra.mxu0 %v65
    %83 = vmatprep.subr.mxu0 0.0
    %84 = vmatpush1.xpose.msra.mxu0 %v66
    %85 = vmatprep.subr.mxu0 0.0
    %86 = vmatpush1.xpose.msra.mxu0 %v67
    %87 = vmatprep.subr.mxu0 0.0
    %88 = vmatpush1.xpose.msra.mxu0 %v68
    %89 = vmatprep.subr.mxu0 0.0
    %90 = vmatpush1.xpose.msra.mxu0 %v69
    %91 = vmatprep.subr.mxu0 0.0
    %92 = vmatpush1.xpose.msra.mxu0 %v70
    %93 = vmatprep.subr.mxu0 0.0
    %94 = vmatpush1.xpose.msra.mxu0 %v71
    %95 = vmatprep.subr.mxu0 0.0
    %96 = vmatpush1.xpose.msra.mxu0 %v72
    %97 = vmatprep.subr.mxu0 0.0
    %98 = vmatpush1.xpose.msra.mxu0 %v73
    %99 = vmatprep.subr.mxu0 0.0
    %100 = vmatpush1.xpose.msra.mxu0 %v74
    %101 = vmatprep.subr.mxu0 0.0
    %102 = vmatpush1.xpose.msra.mxu0 %v75
    %103 = vmatprep.subr.mxu0 0.0
    %104 = vmatpush1.xpose.msra.mxu0 %v76
    %105 = vmatprep.subr.mxu0 0.0
    %106 = vmatpush1.xpose.msra.mxu0 %v77
    %107 = vmatprep.subr.mxu0 0.0
    %108 = vmatpush1.xpose.msra.mxu0 %v78
    %109 = vmatprep.subr.mxu0 0.0
    %110 = vmatpush1.xpose.msra.mxu0 %v79
    %111 = vmatprep.subr.mxu0 0.0
    %112 = vmatpush1.xpose.msra.mxu0 %v80
    %113 = vmatprep.subr.mxu0 0.0
    %114 = vmatpush1.xpose.msra.mxu0 0.0
    %115 = vmatprep.subr.mxu0 0.0
    %116 = vmatpush1.xpose.msra.mxu0 0.0
    %117 = vmatprep.subr.mxu0 0.0
    %118 = vmatpush1.xpose.msra.mxu0 0.0
    %119 = vmatprep.subr.mxu0 0.0
    %120 = vmatpush1.xpose.msra.mxu0 0.0
    %121 = vmatprep.subr.mxu0 0.0
    %122 = vmatpush1.xpose.msra.mxu0 0.0
    %123 = vmatprep.subr.mxu0 0.0
    %124 = vmatpush1.xpose.msra.mxu0 0.0
    %125 = vmatprep.subr.mxu0 0.0
    %126 = vmatpush1.xpose.msra.mxu0 0.0
    %127 = vmatprep.subr.mxu0 0.0
    %128 = vmatpush1.xpose.msra.mxu0 0.0
    %129 = vmatprep.subr.mxu0 0.0
    %130 = vmatpush1.xpose.msra.mxu0 0.0
    %131 = vmatprep.subr.mxu0 0.0
    %132 = vmatpush1.xpose.msra.mxu0 0.0
    %133 = vmatprep.subr.mxu0 0.0
    %134 = vmatpush1.xpose.msra.mxu0 0.0
    %135 = vmatprep.subr.mxu0 0.0
    %136 = vmatpush1.xpose.msra.mxu0 0.0
    %137 = vmatprep.subr.mxu0 0.0
    %138 = vmatpush1.xpose.msra.mxu0 0.0
    %139 = vmatprep.subr.mxu0 0.0
    %140 = vmatpush1.xpose.msra.mxu0 0.0
    %141 = vmatprep.subr.mxu0 0.0
    %142 = vmatpush1.xpose.msra.mxu0 0.0
    %143 = vmatprep.subr.mxu0 0.0
    %144 = vmatpush1.xpose.msra.mxu0 0.0
    %145 = vmatprep.mubr.f32.mxu0 0.0
    %146 = vmatmul.mubr.f32.gmra.mrb[0].mxu0 %v40
    %v147 = vpop.f32.mrb[0].mxu0
    %v148 = vadd.f32 0.0, %v147
    %v149 = vpop.f32.mrb[0].mxu0
    %150 = vmatprep.mubr.f32.mxu0 0.0
    %151 = vmatmul.mubr.f32.gmra.mrb[0].mxu0 %v41
    %v152 = vpop.f32.mrb[0].mxu0
    %v153 = vadd.f32 0.0, %v152
    %v154 = vpop.f32.mrb[0].mxu0
    %155 = vmatprep.mubr.f32.mxu0 0.0
    %156 = vmatmul.mubr.f32.gmra.mrb[0].mxu0 %v42
    %v157 = vpop.f32.mrb[0].mxu0
    %v158 = vadd.f32 0.0, %v157
    %v159 = vpop.f32.mrb[0].mxu0
    %160 = vmatprep.mubr.f32.mxu0 0.0
    %161 = vmatmul.mubr.f32.gmra.mrb[0].mxu0 %v43
    %v162 = vpop.f32.mrb[0].mxu0
    %v163 = vadd.f32 0.0, %v162
    %v164 = vpop.f32.mrb[0].mxu0
    %165 = vmatprep.mubr.f32.mxu0 0.0
    %166 = vmatmul.mubr.f32.gmra.mrb[0].mxu0 %v44
    %v167 = vpop.f32.mrb[0].mxu0
    %v168 = vadd.f32 0.0, %v167
    %v169 = vpop.f32.mrb[0].mxu0
    %170 = vmatprep.mubr.f32.mxu0 0.0
    %171 = vmatmul.mubr.f32.gmra.mrb[0].mxu0 %v45
    %v172 = vpop.f32.mrb[0].mxu0
    %v173 = vadd.f32 0.0, %v172
    %v174 = vpop.f32.mrb[0].mxu0
    %175 = vmatprep.mubr.f32.mxu0 0.0
    %176 = vmatmul.mubr.f32.gmra.mrb[0].mxu0 %v46
    %v177 = vpop.f32.mrb[0].mxu0
    %v178 = vadd.f32 0.0, %v177
    %v179 = vpop.f32.mrb[0].mxu0
    %180 = vmatprep.mubr.f32.mxu0 0.0
    %181 = vmatmul.mubr.f32.gmra.mrb[0].mxu0 %v47
    %v182 = vpop.f32.mrb[0].mxu0
    %v183 = vadd.f32 0.0, %v182
    %v184 = vpop.f32.mrb[0].mxu0
    %185 = vmatprep.mubr.f32.mxu0 0.0
    %186 = vmatmul.mubr.f32.gmra.mrb[0].mxu0 %v48
    %v187 = vpop.f32.mrb[0].mxu0
    %v188 = vadd.f32 0.0, %v187
    %v189 = vpop.f32.mrb[0].mxu0
    %190 = vmatprep.mubr.f32.mxu0 0.0
    %191 = vmatmul.mubr.f32.gmra.mrb[0].mxu0 %v49
    %v192 = vpop.f32.mrb[0].mxu0
    %v193 = vadd.f32 0.0, %v192
    %v194 = vpop.f32.mrb[0].mxu0
    %195 = vmatprep.mubr.f32.mxu0 0.0
    %196 = vmatmul.mubr.f32.gmra.mrb[0].mxu0 %v50
    %v197 = vpop.f32.mrb[0].mxu0
    %v198 = vadd.f32 0.0, %v197
    %v199 = vpop.f32.mrb[0].mxu0
    %200 = vmatprep.mubr.f32.mxu0 0.0
    %201 = vmatmul.mubr.f32.gmra.mrb[0].mxu0 %v51
    %v202 = vpop.f32.mrb[0].mxu0
    %v203 = vadd.f32 0.0, %v202
    %v204 = vpop.f32.mrb[0].mxu0
    %205 = vmatprep.mubr.f32.mxu0 0.0
    %206 = vmatmul.mubr.f32.gmra.mrb[0].mxu0 %v52
    %v207 = vpop.f32.mrb[0].mxu0
    %v208 = vadd.f32 0.0, %v207
    %v209 = vpop.f32.mrb[0].mxu0
    %210 = vmatprep.mubr.f32.mxu0 0.0
    %211 = vmatmul.mubr.f32.gmra.mrb[0].mxu0 %v53
    %v212 = vpop.f32.mrb[0].mxu0
    %v213 = vadd.f32 0.0, %v212
    %v214 = vpop.f32.mrb[0].mxu0
    %215 = vmatprep.mubr.f32.mxu0 0.0
    %216 = vmatmul.mubr.f32.gmra.mrb[0].mxu0 %v54
    %v217 = vpop.f32.mrb[0].mxu0
    %v218 = vadd.f32 0.0, %v217
    %v219 = vpop.f32.mrb[0].mxu0
    %220 = vmatprep.mubr.f32.mxu0 0.0
    %221 = vmatmul.mubr.f32.gmra.mrb[0].mxu0 %v55
    %v222 = vpop.f32.mrb[0].mxu0
    %v223 = vadd.f32 0.0, %v222
    %v224 = vpop.f32.mrb[0].mxu0
    %225 = vmatprep.mubr.f32.mxu0 0.0
    %226 = vmatmul.mubr.f32.gmra.mrb[0].mxu0 %v56
    %v227 = vpop.f32.mrb[0].mxu0
    %v228 = vadd.f32 0.0, %v227
    %v229 = vpop.f32.mrb[0].mxu0
    %230 = vmatprep.mubr.f32.mxu0 0.0
    %231 = vmatmul.mubr.f32.gmra.mrb[0].mxu0 %v57
    %v232 = vpop.f32.mrb[0].mxu0
    %v233 = vadd.f32 0.0, %v232
    %v234 = vpop.f32.mrb[0].mxu0
    %235 = vmatprep.mubr.f32.mxu0 0.0
    %236 = vmatmul.mubr.f32.gmra.mrb[0].mxu0 %v58
    %v237 = vpop.f32.mrb[0].mxu0
    %v238 = vadd.f32 0.0, %v237
    %v239 = vpop.f32.mrb[0].mxu0
    %240 = vmatprep.mubr.f32.mxu0 0.0
    %241 = vmatmul.mubr.f32.gmra.mrb[0].mxu0 %v59
    %v242 = vpop.f32.mrb[0].mxu0
    %v243 = vadd.f32 0.0, %v242
    %v244 = vpop.f32.mrb[0].mxu0
    %245 = vmatprep.mubr.f32.mxu0 0.0
    %246 = vmatmul.mubr.f32.gmra.mrb[0].mxu0 %v60
    %v247 = vpop.f32.mrb[0].mxu0
    %v248 = vadd.f32 0.0, %v247
    %v249 = vpop.f32.mrb[0].mxu0
    %250 = vmatprep.mubr.f32.mxu0 0.0
    %251 = vmatmul.mubr.f32.gmra.mrb[0].mxu0 %v61
    %v252 = vpop.f32.mrb[0].mxu0
    %v253 = vadd.f32 0.0, %v252
    %v254 = vpop.f32.mrb[0].mxu0
    %255 = vmatprep.mubr.f32.mxu0 0.0
    %256 = vmatmul.mubr.f32.gmra.mrb[0].mxu0 %v62
    %v257 = vpop.f32.mrb[0].mxu0
    %v258 = vadd.f32 0.0, %v257
    %v259 = vpop.f32.mrb[0].mxu0
    %260 = vmatprep.mubr.f32.mxu0 0.0
    %261 = vmatmul.mubr.f32.gmra.mrb[0].mxu0 %v63
    %v262 = vpop.f32.mrb[0].mxu0
    %v263 = vadd.f32 0.0, %v262
    %v264 = vpop.f32.mrb[0].mxu0
    %265 = vmatprep.mubr.f32.mxu0 0.0
    %266 = vmatmul.mubr.f32.gmra.mrb[0].mxu0 %v64
    %v267 = vpop.f32.mrb[0].mxu0
    %v268 = vadd.f32 0.0, %v267
    %v269 = vpop.f32.mrb[0].mxu0
    %270 = vdwg.mxu0
    %v271 = vmax.f32 %v148, 0.0
    %v272 = vmax.f32 %v153, 0.0
    %v273 = vmax.f32 %v158, 0.0
    %v274 = vmax.f32 %v163, 0.0
    %v275 = vmax.f32 %v168, 0.0
    %v276 = vmax.f32 %v173, 0.0
    %v277 = vmax.f32 %v178, 0.0
    %v278 = vmax.f32 %v183, 0.0
    %v279 = vmax.f32 %v188, 0.0
    %v280 = vmax.f32 %v193, 0.0
    %v281 = vmax.f32 %v198, 0.0
    %v282 = vmax.f32 %v203, 0.0
    %v283 = vmax.f32 %v208, 0.0
    %v284 = vmax.f32 %v213, 0.0
    %v285 = vmax.f32 %v218, 0.0
    %v286 = vmax.f32 %v223, 0.0
    %v287 = vmax.f32 %v228, 0.0
    %v288 = vmax.f32 %v233, 0.0
    %v289 = vmax.f32 %v238, 0.0
    %v290 = vmax.f32 %v243, 0.0
    %v291 = vmax.f32 %v248, 0.0
    %v292 = vmax.f32 %v253, 0.0
    %v293 = vmax.f32 %v258, 0.0
    %v294 = vmax.f32 %v263, 0.0
    %v295 = vmax.f32 %v268, 0.0
    %296 = vst [vmem:[#allocation7] sm:$0xff] %v271
    %297 = vst [vmem:[#allocation7 + $0x8] sm:$0xff] %v272
    %298 = vst [vmem:[#allocation7 + $0x10] sm:$0xff] %v273
    %299 = vst [vmem:[#allocation7 + $0x18] sm:$0xff] %v274
    %300 = vst [vmem:[#allocation7 + $0x20] sm:$0xff] %v275
    %301 = vst [vmem:[#allocation7 + $0x28] sm:$0xff] %v276
    %302 = vst [vmem:[#allocation7 + $0x30] sm:$0xff] %v277
    %303 = vst [vmem:[#allocation7 + $0x38] sm:$0xff] %v278
    %304 = vst [vmem:[#allocation7 + $0x40] sm:$0xff] %v279
    %305 = vst [vmem:[#allocation7 + $0x48] sm:$0xff] %v280
    %306 = vst [vmem:[#allocation7 + $0x50] sm:$0xff] %v281
    %307 = vst [vmem:[#allocation7 + $0x58] sm:$0xff] %v282
    %308 = vst [vmem:[#allocation7 + $0x60] sm:$0xff] %v283
    %309 = vst [vmem:[#allocation7 + $0x68] sm:$0xff] %v284
    %310 = vst [vmem:[#allocation7 + $0x70] sm:$0xff] %v285
    %311 = vst [vmem:[#allocation7 + $0x78] sm:$0xff] %v286
    %312 = vst [vmem:[#allocation7 + $0x80] sm:$0xff] %v287
    %313 = vst [vmem:[#allocation7 + $0x88] sm:$0xff] %v288
    %314 = vst [vmem:[#allocation7 + $0x90] sm:$0xff] %v289
    %315 = vst [vmem:[#allocation7 + $0x98] sm:$0xff] %v290
    %316 = vst [vmem:[#allocation7 + $0xa0] sm:$0xff] %v291
    %317 = vst [vmem:[#allocation7 + $0xa8] sm:$0xff] %v292
    %318 = vst [vmem:[#allocation7 + $0xb0] sm:$0xff] %v293
    %319 = vst [vmem:[#allocation7 + $0xb8] sm:$0xff] %v294
    %320 = vst [vmem:[#allocation7 + $0xc0] sm:$0xff] %v295
    // Predicated region
    $region18: #{tpu_custom_call.1} parent=1 // pred_check
      _
    $region19: #{tpu_custom_call.1} parent=1 // pred_check_branch
      %322 = sbr.rel (0) target = $region21
    $region20: #{tpu_custom_call.1} parent=1 // pred_region
      %s324 = ssub.s32 3200, 3200
      %325 = vsyncadd [#allocation4], %s324
      %s326 = sshll.u32 [#allocation7], 4
      %s327 = int_to_ptr.vmem [resolvable:$true] %s326
      %332 = dma.vmem_to_hbm [thread:$0]  %s327, 3200, %s2, [#allocation4], 128, 128, 8
    $region21: #{tpu_custom_call.1} parent=1 // pred_fallthru
      _
    // Predicated region
    $region22: #{tpu_custom_call.1} parent=1 // pred_check
      _
    $region23: #{tpu_custom_call.1} parent=1 // pred_check_branch
      %334 = sbr.rel (0) target = $region25
    $region24: #{tpu_custom_call.1} parent=1 // pred_region
      %335 = dma.done [#allocation4], 3200
    $region25: #{tpu_custom_call.1} parent=1 // pred_fallthru
      _
    %336 = vsyncpa [#allocation3], 1
    %337 = vsyncpa [#allocation6], 1
    %338 = vsyncpa [#allocation4], 1

</llo_original>
